<compile_context>
chip_gen: v6e
topology: v6e:2x2x1
jax: 0.10.0
libtpu: 0.0.40
codegen_flags: <defaults>
</compile_context>

<pallas_src>
import functools

import jax
import jax.numpy as jnp
from jax.experimental import pallas as pl
from jax.experimental.pallas import tpu as pltpu

_LANES = 128
_SUBLANES = 8
_LANE_MULT = 8                      # lane-dense slab width C = 1024
_MAX_BLOCK_ROWS = 512               # (512, 1024) f32 block = 2 MiB per buffer
_FUSED_MAX_ROWS = 512               # mean_std fuses into one call when slab <= 2 MiB
_VMEM_LIMIT = 32 * 1024 * 1024      # safe on v5e/v6e (128 MiB) and v7x (64 MiB)


# ------------------------------------------------------------------ kernels

def _binarize_const_kernel(x_ref, o_ref, *, threshold):
    # Threshold baked in as an immediate ('bin' / 'byte' paths). Cast in-kernel.
    o_ref[...] = (x_ref[...].astype(jnp.float32) >= threshold).astype(jnp.float32)


def _binarize_smem_kernel(thr_ref, x_ref, o_ref):
    # thr_ref: (1,) f32 in SMEM (data-dependent mean_std threshold).
    o_ref[...] = (x_ref[...].astype(jnp.float32) >= thr_ref[0]).astype(jnp.float32)


def _stats_kernel(x_ref, out_ref, sum_acc, sq_acc):
    # Full-vreg elementwise accumulation (pure VPU in the hot loop); the sublane
    # (XLU) reduction happens exactly once, at the last grid step.
    @pl.when(pl.program_id(0) == 0)
    def _():
        sum_acc[...] = jnp.zeros_like(sum_acc)
        sq_acc[...] = jnp.zeros_like(sq_acc)
        out_ref[...] = jnp.zeros_like(out_ref)

    xv = x_ref[...].astype(jnp.float32)
    sum_acc[...] = sum_acc[...] + xv
    sq_acc[...] = sq_acc[...] + xv * xv

    @pl.when(pl.program_id(0) == pl.num_programs(0) - 1)
    def _():
        out_ref[0:1, :] = jnp.sum(sum_acc[...], axis=0, keepdims=True)
        out_ref[1:2, :] = jnp.sum(sq_acc[...], axis=0, keepdims=True)


def _meanstd_fused_kernel(x_ref, o_ref, *, n, pad):
    # Whole slab resident in VMEM: centered two-pass mean/std + binarize in one call
    # -> a single HBM read of x and a single HBM write of the output.
    xv = x_ref[...].astype(jnp.float32)
    mean = jnp.sum(xv) / n
    d = xv - mean
    # Each padded zero contributes (0 - mean)^2 to the centered sum of squares.
    css = jnp.sum(d * d) - float(pad) * mean * mean
    var = jnp.maximum(css, 0.0) / (n - 1)            # torch.std(): unbiased (ddof=1)
    thr = mean + jnp.sqrt(var)
    o_ref[...] = (xv >= thr).astype(jnp.float32)


# ------------------------------------------------------------------ wrappers

def _make_slab(x, max_block_rows):
    """Flatten to a lane-dense (rows, 1024) slab in the input's native dtype."""
    n = x.size
    C = _LANES * _LANE_MULT
    rows = max(1, pl.cdiv(n, C))
    rows = -(-rows // _SUBLANES) * _SUBLANES          # multiple of 8 (sublanes)
    block_rows = min(max_block_rows, rows)
    rows = -(-rows // block_rows) * block_rows        # multiple of the block height
    pad = rows * C - n
    xf = x.reshape(-1)
    if pad:
        xf = jnp.pad(xf, (0, pad))                    # only materialized when needed
    return xf.reshape(rows, C), n, pad, block_rows


def _binarize_call(xp, block_rows, kernel, *smem_args):
    rows, C = xp.shape
    in_specs = [pl.BlockSpec(memory_space=pltpu.MemorySpace.SMEM)] * len(smem_args)
    in_specs.append(pl.BlockSpec((block_rows, C), lambda i: (i, 0)))
    return pl.pallas_call(
        kernel,
        out_shape=jax.ShapeDtypeStruct((rows, C), jnp.float32),
        grid=(rows // block_rows,),
        in_specs=in_specs,
        out_specs=pl.BlockSpec((block_rows, C), lambda i: (i, 0)),
        compiler_params=pltpu.CompilerParams(
            dimension_semantics=("parallel",),        # shard over v7x's 2 TCs
            vmem_limit_bytes=_VMEM_LIMIT),
    )(*smem_args, xp)


def _stats_call(xp, block_rows):
    rows, C = xp.shape
    out = pl.pallas_call(
        _stats_kernel,
        out_shape=jax.ShapeDtypeStruct((_SUBLANES, C), jnp.float32),
        grid=(rows // block_rows,),
        in_specs=[pl.BlockSpec((block_rows, C), lambda i: (i, 0))],
        out_specs=pl.BlockSpec((_SUBLANES, C), lambda i: (0, 0)),
        scratch_shapes=[pltpu.VMEM((block_rows, C), jnp.float32),
                        pltpu.VMEM((block_rows, C), jnp.float32)],
        compiler_params=pltpu.CompilerParams(
            dimension_semantics=("arbitrary",),       # accumulation axis
            vmem_limit_bytes=_VMEM_LIMIT),
    )(xp)
    # tiny final lane reduction (C values each) in JAX glue
    return jnp.sum(out[0]), jnp.sum(out[1])


def _meanstd_fused_call(xp, n):
    rows, C = xp.shape
    kern = functools.partial(_meanstd_fused_kernel, n=n, pad=rows * C - n)
    return pl.pallas_call(
        kern,
        out_shape=jax.ShapeDtypeStruct((rows, C), jnp.float32),
        grid=(1,),
        in_specs=[pl.BlockSpec((rows, C), lambda i: (0, 0))],
        out_specs=pl.BlockSpec((rows, C), lambda i: (0, 0)),
        compiler_params=pltpu.CompilerParams(vmem_limit_bytes=_VMEM_LIMIT),
    )(xp)


def binarize_transform(x, threshold_type: str = "bin", *,
                       max_block_rows: int = _MAX_BLOCK_ROWS,
                       fuse_max_rows: int = _FUSED_MAX_ROWS):
    xp, n, pad, block_rows = _make_slab(x, max_block_rows)
    rows, _ = xp.shape

    if threshold_type == "bin":
        out = _binarize_call(
            xp, block_rows,
            functools.partial(_binarize_const_kernel, threshold=0.5))
    elif threshold_type == "byte":
        out = _binarize_call(
            xp, block_rows,
            functools.partial(_binarize_const_kernel, threshold=255.0 / 2.0))
    elif threshold_type == "mean_std":
        if rows <= fuse_max_rows:
            out = _meanstd_fused_call(xp, n)
        else:
            s, ss = _stats_call(xp, block_rows)
            mean = s / n
            # TODO(synk): the one-pass (ss - n*mean^2) formula in f32 can cancel for
            # large-mean data; the fused VMEM-resident path uses a centered two-pass.
            var = jnp.maximum(ss - n * mean * mean, 0.0) / (n - 1)
            thr = (mean + jnp.sqrt(var)).astype(jnp.float32).reshape(1)
            out = _binarize_call(xp, block_rows, _binarize_smem_kernel, thr)
    else:
        # TODO(synk): torch also raises when a (python) mean_std threshold is exactly
        # 0.0 (falsy); that data-dependent check cannot be reproduced on traced values.
        raise ValueError("Threshold value is None")

    y = out.reshape(-1)
    if pad:
        y = y[:n]
    return y.reshape(x.shape)


# ------------------------------------------------------------------ self-test

def _reference(x, threshold_type):
    xf = x.astype(jnp.float32)
    if threshold_type == "bin":
        t = 0.5
    elif threshold_type == "byte":
        t = 255.0 / 2.0
    else:
        t = jnp.mean(xf) + jnp.std(xf, ddof=1)
    return (xf >= t).astype(jnp.float32)


def _check(y, x, ttype):
    ref = _reference(x, ttype)
    if y.shape != x.shape or y.dtype != jnp.float32:
        return False
    if ttype != "mean_std":
        return bool(jnp.all(y == ref))
    # mean_std: the kernel and the XLA reference may round the threshold slightly
    # differently; any mismatching element must sit exactly at the decision boundary.
    xf = x.astype(jnp.float32)
    t_ref = jnp.mean(xf) + jnp.std(xf, ddof=1)
    mism = y != ref
    near = jnp.abs(xf - t_ref) <= (1e-5 * jnp.abs(t_ref) + 1e-6)
    return bool(jnp.all(jnp.where(mism, near, True)))


if __name__ == "__main__":
    key = jax.random.PRNGKey(0)
    x = jax.random.uniform(key, (2, 4, 16, 16), dtype=jnp.float32)  # NCHW

    ok = True
    for ttype in ("bin", "byte", "mean_std"):
        y = binarize_transform(x, ttype)
        jax.block_until_ready(y)
        ok &= _check(y, x, ttype)

    # Also exercise the tiled (multi-grid-step) mean_std fallback with forced small blocks.
    x2 = jax.random.uniform(jax.random.PRNGKey(1), (2, 4, 64, 64), dtype=jnp.float32)
    y2 = binarize_transform(x2, "mean_std", max_block_rows=8, fuse_max_rows=0)
    jax.block_until_ready(y2)
    ok &= _check(y2, x2, "mean_std")

    print("KERNEL_OK" if ok else "KERNEL_MISMATCH")
</pallas_src>

<mosaic_0001>
module attributes {stable_mosaic.version = 11 : i64} {
  func.func @_binarize_const_kernel(%arg0: i32, %arg1: memref<8x1024xf32, #tpu.memory_space<vmem>>, %arg2: memref<8x1024xf32, #tpu.memory_space<vmem>>) attributes {dimension_semantics = [#tpu.dimension_semantics<parallel>], iteration_bounds = array<i64: 1>, scalar_prefetch = 0 : i64, scratch_operands = 0 : i64, tpu.core_type = #tpu.core_type<tc>, window_params = [{transform_indices = @transform_0, window_bounds = array<i64: 8, 1024>}, {transform_indices = @transform_1, window_bounds = array<i64: 8, 1024>}]} {
    %c0 = arith.constant 0 : index
    %c0_0 = arith.constant 0 : index
    %0 = vector.load %arg1[%c0, %c0_0] : memref<8x1024xf32, #tpu.memory_space<vmem>>, vector<8x1024xf32>
    %cst = arith.constant 5.000000e-01 : f32
    %1 = vector.broadcast %cst : f32 to vector<8x1024xf32>
    %2 = arith.cmpf oge, %0, %1 : vector<8x1024xf32>
    %3 = arith.extui %2 : vector<8x1024xi1> to vector<8x1024xi32>
    %4 = arith.sitofp %3 : vector<8x1024xi32> to vector<8x1024xf32>
    %c0_1 = arith.constant 0 : index
    %c0_2 = arith.constant 0 : index
    %5 = vector.load %arg2[%c0_1, %c0_2] : memref<8x1024xf32, #tpu.memory_space<vmem>>, vector<8x1024xf32>
    tpu.vector_store %arg2[%c0_1, %c0_2], %4 {strides = array<i32>} : memref<8x1024xf32, #tpu.memory_space<vmem>>, vector<8x1024xf32>,
    return
  }
  func.func @transform_0(%arg0: i32) -> (i32, i32) {
    %c0_i32 = arith.constant 0 : i32
    %c0_i32_0 = arith.constant 0 : i32
    return %arg0, %c0_i32 : i32, i32
  }
  func.func @transform_1(%arg0: i32) -> (i32, i32) {
    %c0_i32 = arith.constant 0 : i32
    %c0_i32_0 = arith.constant 0 : i32
    return %arg0, %c0_i32 : i32, i32
  }
}

</mosaic_0001>

<llo_original>
// kernel: tpu_custom_call.1
$region0: #{tpu_custom_call.1}
  #allocation0 [shape = 'u32[]', space=smem, size = 0x4, offset = 0x4, fixed_abs, tag = 'smem constant byte address 0x4 - core index']
  #allocation1 [shape = 'u32[144,128]{1,0:T(1,128)}', space=vmem, size = 0x12000, scoped, tag = 'internal scratch']
  %s0 = inlined_call_operand.hbm [shape: f32[8,1024], index: 0, kind: input, shape index: {}]
  %s1 = inlined_call_operand.hbm [shape: f32[8,1024], index: 1, kind: output, shape index: {}]
  %s2 = sld [smem:[#allocation0]]
  $region18: #{tpu_custom_call.1} parent=0
    _
  %s4 = ssub.s32 1, %s2
  %s5 = scalar_select 0, %s4, %s2
  $region1: #{tpu_custom_call.1} parent=0
    #allocation2 [shape = 'u8[32768]{0}', space=vmem, size = 0x8000, scoped, tag = 'input window, operand 0, single buffered']
    #allocation3 [shape = 's32[1]{0}', space=sflag, size = 0x4, scoped, tag = 'scoped memory for tpu_custom_call.1']
    #allocation4 [shape = 's32[1]{0}', space=sflag, size = 0x4, scoped, tag = 'scoped memory for tpu_custom_call.1']
    #allocation5 [shape = 'u8[32768]{0}', space=vmem, size = 0x8000, scoped, tag = 'output window, operand 0, single buffered']
    %6 = vsyncpa [#allocation3], 0
    %7 = vsyncpa [#allocation4], 0
    // Predicated region
    $region2: #{tpu_custom_call.1} parent=1 // pred_check
      _
    $region3: #{tpu_custom_call.1} parent=1 // pred_check_branch
      %9 = sbr.rel (0) target = $region5
    $region4: #{tpu_custom_call.1} parent=1 // pred_region
      %s11 = ssub.s32 1024, 1024
      %12 = vsyncadd [#allocation3], %s11
      %s14 = sshll.u32 [#allocation2], 4
      %s15 = int_to_ptr.vmem [resolvable:$true] %s14
      %17 = dma.hbm_to_vmem [thread:$0]  %s0, 1024, %s15, [#allocation3]
    $region5: #{tpu_custom_call.1} parent=1 // pred_fallthru
      _
    // Predicated region
    $region6: #{tpu_custom_call.1} parent=1 // pred_check
      _
    $region7: #{tpu_custom_call.1} parent=1 // pred_check_branch
      %19 = sbr.rel (0) target = $region9
    $region8: #{tpu_custom_call.1} parent=1 // pred_region
      %20 = dma.done [#allocation3], 1024
    $region9: #{tpu_custom_call.1} parent=1 // pred_fallthru
      _
    %v21 = vld [vmem:[#allocation2] sm:$0xff]
    %v22 = vld [vmem:[#allocation2 + $0x8] sm:$0xff]
    %v23 = vld [vmem:[#allocation2 + $0x10] sm:$0xff]
    %v24 = vld [vmem:[#allocation2 + $0x18] sm:$0xff]
    %v25 = vld [vmem:[#allocation2 + $0x20] sm:$0xff]
    %v26 = vld [vmem:[#allocation2 + $0x28] sm:$0xff]
    %v27 = vld [vmem:[#allocation2 + $0x30] sm:$0xff]
    %v28 = vld [vmem:[#allocation2 + $0x38] sm:$0xff]
    %vm29 = vcmp.ge.f32.partialorder %v21, 0.5
    %vm30 = vcmp.ge.f32.partialorder %v22, 0.5
    %vm31 = vcmp.ge.f32.partialorder %v23, 0.5
    %vm32 = vcmp.ge.f32.partialorder %v24, 0.5
    %vm33 = vcmp.ge.f32.partialorder %v25, 0.5
    %vm34 = vcmp.ge.f32.partialorder %v26, 0.5
    %vm35 = vcmp.ge.f32.partialorder %v27, 0.5
    %vm36 = vcmp.ge.f32.partialorder %v28, 0.5
    %v37 = vsel %vm29, 1, 0
    %v38 = vsel %vm30, 1, 0
    %v39 = vsel %vm31, 1, 0
    %v40 = vsel %vm32, 1, 0
    %v41 = vsel %vm33, 1, 0
    %v42 = vsel %vm34, 1, 0
    %v43 = vsel %vm35, 1, 0
    %v44 = vsel %vm36, 1, 0
    %v45 = vcvt.s32.f32 %v37
    %v46 = vcvt.s32.f32 %v38
    %v47 = vcvt.s32.f32 %v39
    %v48 = vcvt.s32.f32 %v40
    %v49 = vcvt.s32.f32 %v41
    %v50 = vcvt.s32.f32 %v42
    %v51 = vcvt.s32.f32 %v43
    %v52 = vcvt.s32.f32 %v44
    %53 = vst [vmem:[#allocation5] sm:$0xff] %v45
    %54 = vst [vmem:[#allocation5 + $0x8] sm:$0xff] %v46
    %55 = vst [vmem:[#allocation5 + $0x10] sm:$0xff] %v47
    %56 = vst [vmem:[#allocation5 + $0x18] sm:$0xff] %v48
    %57 = vst [vmem:[#allocation5 + $0x20] sm:$0xff] %v49
    %58 = vst [vmem:[#allocation5 + $0x28] sm:$0xff] %v50
    %59 = vst [vmem:[#allocation5 + $0x30] sm:$0xff] %v51
    %60 = vst [vmem:[#allocation5 + $0x38] sm:$0xff] %v52
    // Predicated region
    $region10: #{tpu_custom_call.1} parent=1 // pred_check
      _
    $region11: #{tpu_custom_call.1} parent=1 // pred_check_branch
      %62 = sbr.rel (0) target = $region13
    $region12: #{tpu_custom_call.1} parent=1 // pred_region
      %s64 = ssub.s32 1024, 1024
      %65 = vsyncadd [#allocation4], %s64
      %s67 = sshll.u32 [#allocation5], 4
      %s68 = int_to_ptr.vmem [resolvable:$true] %s67
      %70 = dma.vmem_to_hbm [thread:$0]  %s68, 1024, %s1, [#allocation4]
    $region13: #{tpu_custom_call.1} parent=1 // pred_fallthru
      _
    // Predicated region
    $region14: #{tpu_custom_call.1} parent=1 // pred_check
      _
    $region15: #{tpu_custom_call.1} parent=1 // pred_check_branch
      %72 = sbr.rel (0) target = $region17
    $region16: #{tpu_custom_call.1} parent=1 // pred_region
      %73 = dma.done [#allocation4], 1024
    $region17: #{tpu_custom_call.1} parent=1 // pred_fallthru
      _
    %74 = vsyncpa [#allocation3], 1
    %75 = vsyncpa [#allocation4], 1

</llo_original>
